<compile_context>
chip_gen: v7x
topology: tpu7x:2x2x1
jax: 0.10.0
libtpu: 0.0.40
codegen_flags: <defaults>
</compile_context>

<pallas_src>
import jax
import jax.numpy as jnp
from jax.experimental import pallas as pl
from jax.experimental.pallas import tpu as pltpu


# VMEM budget for (2 arrays) x (2 pipeline buffers) of the (TN, S) block.
# 40 MiB usage / 48 MiB scoped limit leaves headroom even on v7x's 64 MiB VMEM.
_VMEM_BUDGET_BYTES = 40 * 1024 * 1024
_VMEM_LIMIT_BYTES = 48 * 1024 * 1024


def _copy_kernel(x_ref, o_ref):
    # Pure lane-dense identity copy: (TN, S) in -> (TN, S) out.
    o_ref[...] = x_ref[...]


def _pick_block_rows(N: int, S: int, itemsize: int) -> int:
    """Largest row-block s.t. 2 arrays x 2 buffers x TN x S x itemsize fits budget."""
    per_row = S * itemsize
    tn = _VMEM_BUDGET_BYTES // (4 * per_row)
    tn = max(8, tn)
    if tn >= N:
        return N                      # full dim: always a legal block shape
    return max(8, (tn // 8) * 8)      # keep sublane (second-minor) dim 8-aligned


def unflatten(x: jax.Array, w: int, h: int, *, block_rows: int | None = None) -> jax.Array:
    """Equivalent of torch Unflatten(w, h).forward(x): x.view(N, w, h)."""
    N, S = x.shape
    assert S == w * h, f"S={S} must equal w*h={w * h}"
    itemsize = jnp.dtype(x.dtype).itemsize

    TN = block_rows if block_rows is not None else _pick_block_rows(N, S, itemsize)
    TN = min(TN, N)
    grid = (pl.cdiv(N, TN),)

    flat = pl.pallas_call(
        _copy_kernel,
        out_shape=jax.ShapeDtypeStruct((N, S), x.dtype),
        grid=grid,
        in_specs=[pl.BlockSpec((TN, S), lambda i: (i, 0))],
        out_specs=pl.BlockSpec((TN, S), lambda i: (i, 0)),
        compiler_params=pltpu.CompilerParams(
            dimension_semantics=("parallel",),   # shard over 2 TCs on v7x; no-op on v5e/v6e
            vmem_limit_bytes=_VMEM_LIMIT_BYTES,
        ),
        cost_estimate=pl.CostEstimate(
            flops=0,
            transcendentals=0,
            bytes_accessed=2 * N * S * itemsize,
        ),
    )(x)

    # Free metadata reshape: preserves row-major order == torch x.view(N, w, h).
    return jnp.reshape(flat, (N, w, h))


if __name__ == "__main__":
    key = jax.random.PRNGKey(0)

    # Case 1: shapes consistent with the module (batch N=2, flat S = w*h).
    N, w, h = 2, 8, 16
    S = w * h
    x = jax.random.normal(key, (N, S), dtype=jnp.float32)
    out = jax.block_until_ready(unflatten(x, w, h))
    ref = jnp.reshape(x, (N, w, h))
    assert out.shape == (N, w, h) and out.dtype == x.dtype
    assert bool(jnp.array_equal(out, ref))

    # Case 2: exercise the tiled grid (multiple row-blocks), still small.
    N2, w2, h2 = 32, 4, 32
    S2 = w2 * h2
    x2 = jax.random.normal(jax.random.PRNGKey(0), (N2, S2), dtype=jnp.float32)
    out2 = jax.block_until_ready(unflatten(x2, w2, h2, block_rows=8))
    ref2 = jnp.reshape(x2, (N2, w2, h2))
    assert out2.shape == (N2, w2, h2)
    assert bool(jnp.array_equal(out2, ref2))

    print("KERNEL_OK")
</pallas_src>

<mosaic_0001>
module attributes {stable_mosaic.version = 11 : i64} {
  func.func @_copy_kernel(%arg0: i32, %arg1: memref<2x128xf32, #tpu.memory_space<vmem>>, %arg2: memref<2x128xf32, #tpu.memory_space<vmem>>) attributes {dimension_semantics = [#tpu.dimension_semantics<parallel>], iteration_bounds = array<i64: 1>, scalar_prefetch = 0 : i64, scratch_operands = 0 : i64, tpu.core_type = #tpu.core_type<tc>, window_params = [{transform_indices = @transform_0, window_bounds = array<i64: 2, 128>}, {transform_indices = @transform_1, window_bounds = array<i64: 2, 128>}]} {
    %c0 = arith.constant 0 : index
    %c0_0 = arith.constant 0 : index
    %0 = vector.load %arg1[%c0, %c0_0] : memref<2x128xf32, #tpu.memory_space<vmem>>, vector<2x128xf32>
    %c0_1 = arith.constant 0 : index
    %c0_2 = arith.constant 0 : index
    %1 = vector.load %arg2[%c0_1, %c0_2] : memref<2x128xf32, #tpu.memory_space<vmem>>, vector<2x128xf32>
    tpu.vector_store %arg2[%c0_1, %c0_2], %0 {strides = array<i32>} : memref<2x128xf32, #tpu.memory_space<vmem>>, vector<2x128xf32>,
    return
  }
  func.func @transform_0(%arg0: i32) -> (i32, i32) {
    %c0_i32 = arith.constant 0 : i32
    %c0_i32_0 = arith.constant 0 : i32
    return %arg0, %c0_i32 : i32, i32
  }
  func.func @transform_1(%arg0: i32) -> (i32, i32) {
    %c0_i32 = arith.constant 0 : i32
    %c0_i32_0 = arith.constant 0 : i32
    return %arg0, %c0_i32 : i32, i32
  }
}

</mosaic_0001>

<llo_original>
// kernel: tpu_custom_call.1
$region0: #{tpu_custom_call.1}
  #allocation0 [shape = 'u32[]', space=smem, size = 0x4, offset = 0x4, fixed_abs, tag = 'smem constant byte address 0x4 - core index']
  #allocation1 [shape = 'u32[144,128]{1,0:T(1,128)}', space=vmem, size = 0x12000, scoped, tag = 'internal scratch']
  %s0 = inlined_call_operand.hbm [shape: f32[2,128], index: 0, kind: input, shape index: {}]
  %s1 = inlined_call_operand.hbm [shape: f32[2,128], index: 1, kind: output, shape index: {}]
  %s2 = sld [smem:[#allocation0]]
  $region18: #{tpu_custom_call.1} parent=0
    _
  %s4 = ssub.s32 1, %s2
  %s5 = scalar_select 0, %s4, %s2
  $region1: #{tpu_custom_call.1} parent=0
    #allocation2 [shape = 'u8[1024]{0}', space=vmem, size = 0x400, scoped, tag = 'input window, operand 0, single buffered']
    #allocation3 [shape = 's32[1]{0}', space=sflag, size = 0x4, scoped, tag = 'scoped memory for tpu_custom_call.1']
    #allocation4 [shape = 's32[1]{0}', space=sflag, size = 0x4, scoped, tag = 'scoped memory for tpu_custom_call.1']
    #allocation5 [shape = 'u8[1024]{0}', space=vmem, size = 0x400, scoped, tag = 'output window, operand 0, single buffered']
    %6 = vsyncpa [#allocation3], 0
    %7 = vsyncpa [#allocation4], 0
    // Predicated region
    $region2: #{tpu_custom_call.1} parent=1 // pred_check
      _
    $region3: #{tpu_custom_call.1} parent=1 // pred_check_branch
      %9 = sbr.rel (0) target = $region5
    $region4: #{tpu_custom_call.1} parent=1 // pred_region
      %s11 = ssub.s32 32, 32
      %12 = vsyncadd [#allocation3], %s11
      %s14 = sshll.u32 [#allocation2], 4
      %s15 = int_to_ptr.vmem [resolvable:$true] %s14
      %17 = dma.hbm_to_vmem [thread:$0]  %s0, 32, %s15, [#allocation3]
    $region5: #{tpu_custom_call.1} parent=1 // pred_fallthru
      _
    // Predicated region
    $region6: #{tpu_custom_call.1} parent=1 // pred_check
      _
    $region7: #{tpu_custom_call.1} parent=1 // pred_check_branch
      %19 = sbr.rel (0) target = $region9
    $region8: #{tpu_custom_call.1} parent=1 // pred_region
      %20 = dma.done [#allocation3], 32
    $region9: #{tpu_custom_call.1} parent=1 // pred_fallthru
      _
    %v21 = vld [vmem:[#allocation2] sm:$0x3]
    %22 = vst [vmem:[#allocation5] sm:$0x3] %v21
    // Predicated region
    $region10: #{tpu_custom_call.1} parent=1 // pred_check
      _
    $region11: #{tpu_custom_call.1} parent=1 // pred_check_branch
      %24 = sbr.rel (0) target = $region13
    $region12: #{tpu_custom_call.1} parent=1 // pred_region
      %s26 = ssub.s32 32, 32
      %27 = vsyncadd [#allocation4], %s26
      %s29 = sshll.u32 [#allocation5], 4
      %s30 = int_to_ptr.vmem [resolvable:$true] %s29
      %32 = dma.vmem_to_hbm [thread:$0]  %s30, 32, %s1, [#allocation4]
    $region13: #{tpu_custom_call.1} parent=1 // pred_fallthru
      _
    // Predicated region
    $region14: #{tpu_custom_call.1} parent=1 // pred_check
      _
    $region15: #{tpu_custom_call.1} parent=1 // pred_check_branch
      %34 = sbr.rel (0) target = $region17
    $region16: #{tpu_custom_call.1} parent=1 // pred_region
      %35 = dma.done [#allocation4], 32
    $region17: #{tpu_custom_call.1} parent=1 // pred_fallthru
      _
    %36 = vsyncpa [#allocation3], 1
    %37 = vsyncpa [#allocation4], 1

</llo_original>
